<compile_context>
chip_gen: v6e
topology: v6e:2x2x1
jax: 0.10.0
libtpu: 0.0.40
codegen_flags: <defaults>
</compile_context>

<pallas_src>
import functools

import jax
import jax.numpy as jnp
from jax.experimental import pallas as pl
from jax.experimental.pallas import tpu as pltpu

_LANE = 128
_MIN_BLOCK_ROWS = 32               # multiple of the native sublane tile for f32/bf16/int8
_TARGET_BLOCK_BYTES = 4 << 20      # ~4 MiB per input buffer (dtype-aware row count below)
_VMEM_LIMIT_BYTES = 40 * 1024 * 1024  # > v5e 16 MiB scoped default, < ~48 MiB v7x ceiling


def _round_up(x, m):
    return (x + m - 1) // m * m


def _mse_logits_kernel(logits_ref, targets_ref, out_ref, *, coord_scale, noobj_scale):
    # Compute in f32 in-vreg regardless of the storage dtype (v5e has no bf16 VPU/EUP).
    logits = logits_ref[...].astype(jnp.float32)
    targets = targets_ref[...].astype(jnp.float32)

    # inputs = clamp(sigmoid(logits), 1e-4, 1 - 1e-4); explicit exp form (EUP slot).
    inputs = jnp.clip(1.0 / (1.0 + jnp.exp(-logits)), 0.0001, 1.0 - 0.0001)

    # Exact-equality masks match the PyTorch reference; soft labels give zero loss.
    loss = jnp.where(
        targets == 1.0,
        coord_scale * (inputs - targets) ** 2,
        jnp.where(targets == 0.0, noobj_scale * (inputs * inputs), 0.0),
    )
    out_ref[...] = loss.astype(out_ref.dtype)


def _reference_jnp(logits, targets, coord_scale=5.0, noobj_scale=1.0):
    """Pure-JAX reference (also used as the fallback path). Computes and returns f32."""
    logits = logits.astype(jnp.float32)
    targets = targets.astype(jnp.float32)
    inputs = jnp.clip(1.0 / (1.0 + jnp.exp(-logits)), 0.0001, 1.0 - 0.0001)
    pos_id = (targets == 1.0).astype(jnp.float32)
    neg_id = (targets == 0.0).astype(jnp.float32)
    pos_loss = pos_id * (inputs - targets) ** 2
    neg_loss = neg_id * inputs ** 2
    return coord_scale * pos_loss + noobj_scale * neg_loss


def mse_with_logits_loss(logits, targets, coord_scale=5.0, noobj_scale=1.0,
                         *, min_pallas_elems=1 << 15):
    """Elementwise MSE-with-logits loss. Output shape and dtype == input shape/dtype.

    Note: targets are compared with exact float equality to 1.0 / 0.0 (as in the PyTorch
    module); soft labels yield zero loss by construction.
    """
    assert logits.shape == targets.shape, "logits/targets shape mismatch"
    orig_shape = logits.shape
    orig_dtype = logits.dtype
    n = logits.size

    # Tiny tensors: a Pallas launch is pure overhead.
    # Lane-ragged tensors (numel % 128 != 0): the fused-XLA elementwise graph is already at
    # the HBM roofline, whereas routing them through Pallas would need pad + slice copies
    # (~2-3x extra HBM traffic). Fall back in both cases.
    if n == 0 or n < min_pallas_elems or n % _LANE != 0:
        return _reference_jnp(logits, targets, coord_scale, noobj_scale).astype(orig_dtype)

    rows = n // _LANE
    # Metadata-only reshapes of contiguous arrays: no HBM copies.
    l2 = logits.reshape(rows, _LANE)
    t2 = targets.reshape(rows, _LANE)

    itemsize = jnp.dtype(orig_dtype).itemsize
    # ~4 MiB per input buffer: 8192 rows f32, 16384 rows bf16.
    target_rows = max(_MIN_BLOCK_ROWS, _TARGET_BLOCK_BYTES // (_LANE * itemsize))
    # Keep >= 2 grid steps when possible so v7x megacore can give each TC a step.
    half_rows = _round_up(pl.cdiv(rows, 2), _MIN_BLOCK_ROWS)
    block_rows = min(target_rows, half_rows)
    if block_rows >= rows:
        block_rows = rows  # single full-extent block: always layout-legal
    grid = (pl.cdiv(rows, block_rows),)  # ragged last block handled by Pallas masking

    kernel = functools.partial(
        _mse_logits_kernel,
        coord_scale=float(coord_scale),
        noobj_scale=float(noobj_scale),
    )

    cost = pl.CostEstimate(
        flops=10 * n,
        transcendentals=n,                 # one exp per element
        bytes_accessed=3 * n * itemsize,   # 2 inputs read + 1 output written
    )

    out2 = pl.pallas_call(
        kernel,
        out_shape=jax.ShapeDtypeStruct((rows, _LANE), orig_dtype),
        grid_spec=pltpu.PrefetchScalarGridSpec(
            num_scalar_prefetch=0,
            grid=grid,
            in_specs=[
                # If profiling ever shows exposed DMA at step boundaries, add
                # pipeline_mode=pl.Buffered(3) here (+1 buffer per input, check v7x VMEM).
                pl.BlockSpec((block_rows, _LANE), lambda i: (i, 0)),
                pl.BlockSpec((block_rows, _LANE), lambda i: (i, 0)),
            ],
            out_specs=pl.BlockSpec((block_rows, _LANE), lambda i: (i, 0)),
        ),
        compiler_params=pltpu.CompilerParams(
            dimension_semantics=("parallel",),   # lets v7x megacore shard the grid
            vmem_limit_bytes=_VMEM_LIMIT_BYTES,
        ),
        cost_estimate=cost,
        # If the caller donates `logits`, input_output_aliases={0: 0} would drop one HBM
        # allocation (footprint win only); omitted to keep non-destructive semantics.
    )(l2, t2)

    return out2.reshape(orig_shape)


if __name__ == "__main__":
    key = jax.random.PRNGKey(0)
    k1, k2, k3, k4 = jax.random.split(key, 4)

    # --- Test 1: f32 NCHW detector logits map (lane-aligned); force the Pallas path.
    shape1 = (2, 4, 16, 16)
    logits1 = jax.random.normal(k1, shape1, dtype=jnp.float32)
    targets1 = (jax.random.uniform(k2, shape1) > 0.7).astype(jnp.float32)  # hard {0,1}
    loss1 = jax.block_until_ready(
        mse_with_logits_loss(logits1, targets1, 5.0, 1.0, min_pallas_elems=0))
    ref1 = _reference_jnp(logits1, targets1, 5.0, 1.0)
    assert loss1.shape == shape1 and loss1.dtype == jnp.float32
    assert jnp.allclose(loss1, ref1, atol=1e-5, rtol=1e-5), "f32 mismatch vs reference"

    # --- Test 2: bf16 inputs, multi-step grid with a ragged (masked) last block
    #     (96 rows, block_rows=64 -> grid=(2,), second block half-valid).
    shape2 = (2, 6, 32, 32)
    logits2 = jax.random.normal(k3, shape2, dtype=jnp.float32).astype(jnp.bfloat16)
    targets2 = (jax.random.uniform(k4, shape2) > 0.7).astype(jnp.bfloat16)
    loss2 = jax.block_until_ready(
        mse_with_logits_loss(logits2, targets2, min_pallas_elems=0))
    ref2 = _reference_jnp(logits2, targets2)
    assert loss2.shape == shape2 and loss2.dtype == jnp.bfloat16
    assert jnp.allclose(loss2.astype(jnp.float32), ref2, atol=1e-2, rtol=1e-2), \
        "bf16 mismatch vs reference"

    # --- Test 3: numel not a multiple of 128 -> fused-XLA fallback path (no pad/slice).
    shape3 = (2, 3, 17, 13)
    logits3 = jax.random.normal(k1, shape3, dtype=jnp.float32)
    targets3 = (jax.random.uniform(k2, shape3) > 0.7).astype(jnp.float32)
    loss3 = jax.block_until_ready(
        mse_with_logits_loss(logits3, targets3, min_pallas_elems=0))
    assert loss3.shape == shape3 and loss3.dtype == jnp.float32
    assert jnp.allclose(loss3, _reference_jnp(logits3, targets3), atol=1e-5, rtol=1e-5), \
        "ragged-fallback mismatch vs reference"

    print("KERNEL_OK")
</pallas_src>

<mosaic_0001>
module attributes {stable_mosaic.version = 11 : i64} {
  func.func @_mse_logits_kernel(%arg0: i32, %arg1: memref<16x128xf32, #tpu.memory_space<vmem>>, %arg2: memref<16x128xf32, #tpu.memory_space<vmem>>, %arg3: memref<16x128xf32, #tpu.memory_space<vmem>>) attributes {dimension_semantics = [#tpu.dimension_semantics<parallel>], iteration_bounds = array<i64: 1>, scalar_prefetch = 0 : i64, scratch_operands = 0 : i64, tpu.core_type = #tpu.core_type<tc>, window_params = [{transform_indices = @transform_0, window_bounds = array<i64: 16, 128>}, {transform_indices = @transform_1, window_bounds = array<i64: 16, 128>}, {transform_indices = @transform_2, window_bounds = array<i64: 16, 128>}]} {
    %c0 = arith.constant 0 : index
    %c0_0 = arith.constant 0 : index
    %0 = vector.load %arg1[%c0, %c0_0] : memref<16x128xf32, #tpu.memory_space<vmem>>, vector<16x128xf32>
    %c0_1 = arith.constant 0 : index
    %c0_2 = arith.constant 0 : index
    %1 = vector.load %arg2[%c0_1, %c0_2] : memref<16x128xf32, #tpu.memory_space<vmem>>, vector<16x128xf32>
    %cst = arith.constant 0.000000e+00 : f32
    %2 = vector.broadcast %cst : f32 to vector<16x128xf32>
    %3 = arith.subf %2, %0 : vector<16x128xf32>
    %4 = math.exp %3 : vector<16x128xf32>
    %cst_3 = arith.constant 1.000000e+00 : f32
    %5 = vector.broadcast %cst_3 : f32 to vector<16x128xf32>
    %6 = arith.addf %5, %4 : vector<16x128xf32>
    %cst_4 = arith.constant 1.000000e+00 : f32
    %7 = vector.broadcast %cst_4 : f32 to vector<16x128xf32>
    %8 = arith.divf %7, %6 : vector<16x128xf32>
    %cst_5 = arith.constant 9.99999974E-5 : f32
    %cst_6 = arith.constant 0.999899983 : f32
    %9 = vector.broadcast %cst_5 : f32 to vector<16x128xf32>
    %10 = arith.maximumf %9, %8 : vector<16x128xf32>
    %11 = vector.broadcast %cst_6 : f32 to vector<16x128xf32>
    %12 = arith.minimumf %11, %10 : vector<16x128xf32>
    %cst_7 = arith.constant 1.000000e+00 : f32
    %13 = vector.broadcast %cst_7 : f32 to vector<16x128xf32>
    %14 = arith.cmpf oeq, %1, %13 : vector<16x128xf32>
    %15 = arith.subf %12, %1 : vector<16x128xf32>
    %16 = arith.mulf %15, %15 : vector<16x128xf32>
    %cst_8 = arith.constant 5.000000e+00 : f32
    %17 = vector.broadcast %cst_8 : f32 to vector<16x128xf32>
    %18 = arith.mulf %17, %16 : vector<16x128xf32>
    %cst_9 = arith.constant 0.000000e+00 : f32
    %19 = vector.broadcast %cst_9 : f32 to vector<16x128xf32>
    %20 = arith.cmpf oeq, %1, %19 : vector<16x128xf32>
    %21 = arith.mulf %12, %12 : vector<16x128xf32>
    %cst_10 = arith.constant 1.000000e+00 : f32
    %22 = vector.broadcast %cst_10 : f32 to vector<16x128xf32>
    %23 = arith.mulf %22, %21 : vector<16x128xf32>
    %cst_11 = arith.constant 0.000000e+00 : f32
    %24 = vector.broadcast %cst_11 : f32 to vector<16x128xf32>
    %25 = arith.select %20, %23, %24 : vector<16x128xi1>, vector<16x128xf32>
    %26 = arith.select %14, %18, %25 : vector<16x128xi1>, vector<16x128xf32>
    %c0_12 = arith.constant 0 : index
    %c0_13 = arith.constant 0 : index
    %27 = vector.load %arg3[%c0_12, %c0_13] : memref<16x128xf32, #tpu.memory_space<vmem>>, vector<16x128xf32>
    tpu.vector_store %arg3[%c0_12, %c0_13], %26 {strides = array<i32>} : memref<16x128xf32, #tpu.memory_space<vmem>>, vector<16x128xf32>,
    return
  }
  func.func @transform_0(%arg0: i32) -> (i32, i32) {
    %c0_i32 = arith.constant 0 : i32
    %c0_i32_0 = arith.constant 0 : i32
    return %arg0, %c0_i32 : i32, i32
  }
  func.func @transform_1(%arg0: i32) -> (i32, i32) {
    %c0_i32 = arith.constant 0 : i32
    %c0_i32_0 = arith.constant 0 : i32
    return %arg0, %c0_i32 : i32, i32
  }
  func.func @transform_2(%arg0: i32) -> (i32, i32) {
    %c0_i32 = arith.constant 0 : i32
    %c0_i32_0 = arith.constant 0 : i32
    return %arg0, %c0_i32 : i32, i32
  }
}

</mosaic_0001>

<llo_original>
// kernel: tpu_custom_call.1
$region0: #{tpu_custom_call.1}
  #allocation0 [shape = 'u32[]', space=smem, size = 0x4, offset = 0x4, fixed_abs, tag = 'smem constant byte address 0x4 - core index']
  #allocation1 [shape = 'u32[144,128]{1,0:T(1,128)}', space=vmem, size = 0x12000, scoped, tag = 'internal scratch']
  %s0 = inlined_call_operand.hbm [shape: f32[16,128], index: 0, kind: input, shape index: {}]
  %s1 = inlined_call_operand.hbm [shape: f32[16,128], index: 1, kind: input, shape index: {}]
  %s2 = inlined_call_operand.hbm [shape: f32[16,128], index: 2, kind: output, shape index: {}]
  %s3 = sld [smem:[#allocation0]]
  $region26: #{tpu_custom_call.1} parent=0
    _
  %s5 = ssub.s32 1, %s3
  %s6 = scalar_select 0, %s5, %s3
  $region1: #{tpu_custom_call.1} parent=0
    #allocation2 [shape = 'u8[8192]{0}', space=vmem, size = 0x2000, scoped, tag = 'input window, operand 0, single buffered']
    #allocation3 [shape = 's32[1]{0}', space=sflag, size = 0x4, scoped, tag = 'scoped memory for tpu_custom_call.1']
    #allocation4 [shape = 's32[1]{0}', space=sflag, size = 0x4, scoped, tag = 'scoped memory for tpu_custom_call.1']
    #allocation5 [shape = 'u8[8192]{0}', space=vmem, size = 0x2000, scoped, tag = 'input window, operand 1, single buffered']
    #allocation6 [shape = 's32[1]{0}', space=sflag, size = 0x4, scoped, tag = 'scoped memory for tpu_custom_call.1']
    #allocation7 [shape = 'u8[8192]{0}', space=vmem, size = 0x2000, scoped, tag = 'output window, operand 0, single buffered']
    %7 = vsyncpa [#allocation3], 0
    %8 = vsyncpa [#allocation6], 0
    %9 = vsyncpa [#allocation4], 0
    // Predicated region
    $region2: #{tpu_custom_call.1} parent=1 // pred_check
      _
    $region3: #{tpu_custom_call.1} parent=1 // pred_check_branch
      %11 = sbr.rel (0) target = $region5
    $region4: #{tpu_custom_call.1} parent=1 // pred_region
      %s13 = ssub.s32 256, 256
      %14 = vsyncadd [#allocation3], %s13
      %s15 = sshll.u32 [#allocation2], 4
      %s16 = int_to_ptr.vmem [resolvable:$true] %s15
      %21 = dma.hbm_to_vmem [thread:$0]  %s0, 256, %s16, [#allocation3], 128, 128, 8
    $region5: #{tpu_custom_call.1} parent=1 // pred_fallthru
      _
    // Predicated region
    $region6: #{tpu_custom_call.1} parent=1 // pred_check
      _
    $region7: #{tpu_custom_call.1} parent=1 // pred_check_branch
      %23 = sbr.rel (0) target = $region9
    $region8: #{tpu_custom_call.1} parent=1 // pred_region
      %s25 = ssub.s32 256, 256
      %26 = vsyncadd [#allocation6], %s25
      %s27 = sshll.u32 [#allocation5], 4
      %s28 = int_to_ptr.vmem [resolvable:$true] %s27
      %33 = dma.hbm_to_vmem [thread:$0]  %s1, 256, %s28, [#allocation6], 128, 128, 8
    $region9: #{tpu_custom_call.1} parent=1 // pred_fallthru
      _
    // Predicated region
    $region10: #{tpu_custom_call.1} parent=1 // pred_check
      _
    $region11: #{tpu_custom_call.1} parent=1 // pred_check_branch
      %35 = sbr.rel (0) target = $region13
    $region12: #{tpu_custom_call.1} parent=1 // pred_region
      %36 = dma.done [#allocation3], 256
    $region13: #{tpu_custom_call.1} parent=1 // pred_fallthru
      _
    // Predicated region
    $region14: #{tpu_custom_call.1} parent=1 // pred_check
      _
    $region15: #{tpu_custom_call.1} parent=1 // pred_check_branch
      %38 = sbr.rel (0) target = $region17
    $region16: #{tpu_custom_call.1} parent=1 // pred_region
      %39 = dma.done [#allocation6], 256
    $region17: #{tpu_custom_call.1} parent=1 // pred_fallthru
      _
    %v40 = vld [vmem:[#allocation2] sm:$0xff]
    %v41 = vld [vmem:[#allocation2 + $0x8] sm:$0xff]
    %v42 = vld [vmem:[#allocation5] sm:$0xff]
    %v43 = vld [vmem:[#allocation5 + $0x8] sm:$0xff]
    %v44 = vsub.f32 0.0, %v40
    %v45 = vsub.f32 0.0, %v41
    %v46 = vmul.f32 %v44, 1.442695
    %v47 = vpow.pop %v46
    %v48 = vmul.f32 %v45, 1.442695
    %v49 = vpow.pop %v48
    %v50 = vadd.f32 %v47, 1.0
    %v51 = vadd.f32 %v49, 1.0
    %v52 = vrcp.pop %v50
    %v53 = vmul.f32 1.0, %v52
    %v54 = vrcp.pop %v51
    %v55 = vmul.f32 1.0, %v54
    %v56 = vmax.f32 %v53, 0.0001
    %v57 = vmax.f32 %v55, 0.0001
    %v58 = vmin.f32 %v56, 0.9999
    %v59 = vmin.f32 %v57, 0.9999
    %vm60 = vcmp.eq.f32.partialorder %v42, 1.0
    %vm61 = vcmp.eq.f32.partialorder %v43, 1.0
    %v62 = vsub.f32 %v58, %v42
    %v63 = vsub.f32 %v59, %v43
    %v64 = vmul.f32 %v62, %v62
    %v65 = vmul.f32 %v63, %v63
    %v66 = vmul.f32 %v64, 5.0
    %v67 = vmul.f32 %v65, 5.0
    %vm68 = vcmp.eq.f32.partialorder %v42, 0.0
    %vm69 = vcmp.eq.f32.partialorder %v43, 0.0
    %v70 = vmul.f32 %v58, %v58
    %v71 = vmul.f32 %v59, %v59
    %v72 = vsel %vm68, %v70, 0.0
    %v73 = vsel %vm69, %v71, 0.0
    %v74 = vsel %vm60, %v66, %v72
    %v75 = vsel %vm61, %v67, %v73
    %76 = vst [vmem:[#allocation7] sm:$0xff] %v74
    %77 = vst [vmem:[#allocation7 + $0x8] sm:$0xff] %v75
    // Predicated region
    $region18: #{tpu_custom_call.1} parent=1 // pred_check
      _
    $region19: #{tpu_custom_call.1} parent=1 // pred_check_branch
      %79 = sbr.rel (0) target = $region21
    $region20: #{tpu_custom_call.1} parent=1 // pred_region
      %s81 = ssub.s32 256, 256
      %82 = vsyncadd [#allocation4], %s81
      %s83 = sshll.u32 [#allocation7], 4
      %s84 = int_to_ptr.vmem [resolvable:$true] %s83
      %89 = dma.vmem_to_hbm [thread:$0]  %s84, 256, %s2, [#allocation4], 128, 128, 8
    $region21: #{tpu_custom_call.1} parent=1 // pred_fallthru
      _
    // Predicated region
    $region22: #{tpu_custom_call.1} parent=1 // pred_check
      _
    $region23: #{tpu_custom_call.1} parent=1 // pred_check_branch
      %91 = sbr.rel (0) target = $region25
    $region24: #{tpu_custom_call.1} parent=1 // pred_region
      %92 = dma.done [#allocation4], 256
    $region25: #{tpu_custom_call.1} parent=1 // pred_fallthru
      _
    %93 = vsyncpa [#allocation3], 1
    %94 = vsyncpa [#allocation6], 1
    %95 = vsyncpa [#allocation4], 1

</llo_original>
